<compile_context>
chip_gen: v6e
topology: v6e:2x2x1
jax: 0.10.0
libtpu: 0.0.40
codegen_flags: <defaults>
</compile_context>

<pallas_src>
import math

import jax
import jax.numpy as jnp
from jax import lax
from jax.experimental import pallas as pl
from jax.experimental.pallas import tpu as pltpu


def _round_up(x, m):
    return ((x + m - 1) // m) * m


def _fused_kernel():
    """One MXU matmul per (batch, L-tile): (C_out, K*C_in) @ (K*C_in, L_tile)."""
    def kernel(x_ref, w_ref, b_ref, o_ref):
        acc = jnp.dot(w_ref[...], x_ref[0], preferred_element_type=jnp.float32)
        o_ref[0] = (acc + b_ref[...]).astype(o_ref.dtype)
    return kernel


def _tap_loop_kernel(K, L_tile, dilation):
    """K accumulated MXU matmuls per (batch, L-tile); stride == 1 only.

    x_ref holds the full padded row for this batch element (re-used across all
    L tiles); each tap is a contiguous pl.ds window (no strided lane slicing)."""
    def kernel(x_ref, w_ref, b_ref, o_ref):
        base = pl.multiple_of(pl.program_id(1) * L_tile, L_tile)
        acc = jnp.dot(w_ref[0], x_ref[0, :, pl.ds(base, L_tile)],
                      preferred_element_type=jnp.float32)
        for k in range(1, K):                     # K small & static -> unrolled
            x_k = x_ref[0, :, pl.ds(base + k * dilation, L_tile)]
            acc = acc + jnp.dot(w_ref[k], x_k,
                                preferred_element_type=jnp.float32)
        o_ref[0] = (acc + b_ref[...]).astype(o_ref.dtype)
    return kernel


def conv_norm_forward(x, weight, bias=None, *, stride=1, padding=0, dilation=1,
                      compute_dtype=jnp.bfloat16, l_tile=512, fuse_taps=None):
    """Pallas TPU implementation of ConvNorm.forward (== nn.Conv1d forward).

    x:      (B, C_in, L)
    weight: (C_out, C_in, K)
    bias:   (C_out,) or None
    """
    B, C_in, L = x.shape
    C_out, C_in_w, K = weight.shape
    assert C_in_w == C_in, (C_in_w, C_in)
    out_dtype = x.dtype

    L_out = (L + 2 * padding - dilation * (K - 1) - 1) // stride + 1
    if L_out <= 0:
        raise ValueError("non-positive conv output length")

    if fuse_taps is None:
        fuse_taps = C_in * K <= 256
    if stride != 1:
        fuse_taps = True  # keeps strided slicing out of the kernel entirely

    # Lane-dense output tiling: tile (and total padded length) multiple of 128
    # so output stores are unmasked full-lane vst; ragged tail handled by
    # over-padding and slicing in the wrapper.
    assert l_tile % 128 == 0
    L_tile = min(l_tile, _round_up(L_out, 128))
    n_j = pl.cdiv(L_out, L_tile)
    L_out_pad = n_j * L_tile

    # Input length actually read by the kernel / im2col gather.
    L_need = (L_out_pad - 1) * stride + dilation * (K - 1) + 1
    right_pad = max(L_need - L - padding, 0)
    x_pad = jnp.pad(x, ((0, 0), (0, 0), (padding, right_pad))).astype(compute_dtype)
    L_res = L + padding + right_pad
    # TODO(synk): fold the zero padding into pl.when-guarded edge taps instead of
    # materializing x_pad in HBM for the very-long-sequence mem-bound case.

    if bias is None:
        bias2d = jnp.zeros((C_out, 1), jnp.float32)
    else:
        bias2d = bias.reshape(C_out, 1).astype(jnp.float32)

    grid = (B, n_j)
    cparams = pltpu.CompilerParams(
        dimension_semantics=("parallel", "parallel"),
        # Sized so double-buffered x/out tiles + weight fit v7x's 64 MiB VMEM.
        vmem_limit_bytes=64 * 1024 * 1024)
    out_shape = jax.ShapeDtypeStruct((B, C_out, L_out_pad), out_dtype)

    if fuse_taps:
        # Wrapper-side im2col: stack the K taps on the contraction axis once, so
        # the kernel is a single lane-dense MXU matmul per tile (contraction dim
        # K*C_in instead of K matmuls each contracting only C_in).
        taps = []
        for k in range(K):
            s0 = k * dilation
            if stride == 1:
                taps.append(lax.slice(x_pad, (0, 0, s0), (B, C_in, s0 + L_out_pad)))
            else:
                taps.append(lax.slice(
                    x_pad, (0, 0, s0),
                    (B, C_in, s0 + (L_out_pad - 1) * stride + 1),
                    (1, 1, stride)))
        x_cols = jnp.concatenate(taps, axis=1)          # (B, K*C_in, L_out_pad)
        # w2[o, k*C_in + c] == weight[o, c, k]  (matches x_cols row ordering)
        w2 = jnp.transpose(weight, (0, 2, 1)).reshape(C_out, K * C_in)
        w2 = w2.astype(compute_dtype)
        # TODO(synk): for stride>1 with large C_in*K this im2col costs K x HBM
        # traffic for x; a manual strided-DMA kernel path would avoid it.

        out = pl.pallas_call(
            _fused_kernel(),
            out_shape=out_shape,
            grid_spec=pltpu.PrefetchScalarGridSpec(
                num_scalar_prefetch=0,
                grid=grid,
                in_specs=[
                    pl.BlockSpec((1, K * C_in, L_tile), lambda b, j: (b, 0, j)),
                    pl.BlockSpec((C_out, K * C_in), lambda b, j: (0, 0)),
                    pl.BlockSpec((C_out, 1), lambda b, j: (0, 0)),
                ],
                out_specs=pl.BlockSpec((1, C_out, L_tile), lambda b, j: (b, 0, j)),
            ),
            compiler_params=cparams,
        )(x_cols, w2, bias2d)
    else:
        # Natural layout (stride == 1): the full padded row of one batch element
        # stays resident in VMEM and is re-used across all L tiles (DMA'd once
        # per batch element since its index_map is constant in j).
        w3 = jnp.transpose(weight, (2, 0, 1)).astype(compute_dtype)  # (K, C_out, C_in)
        out = pl.pallas_call(
            _tap_loop_kernel(K, L_tile, dilation),
            out_shape=out_shape,
            grid_spec=pltpu.PrefetchScalarGridSpec(
                num_scalar_prefetch=0,
                grid=grid,
                in_specs=[
                    pl.BlockSpec((1, C_in, L_res), lambda b, j: (b, 0, 0)),
                    pl.BlockSpec((K, C_out, C_in), lambda b, j: (0, 0, 0)),
                    pl.BlockSpec((C_out, 1), lambda b, j: (0, 0)),
                ],
                out_specs=pl.BlockSpec((1, C_out, L_tile), lambda b, j: (b, 0, j)),
            ),
            compiler_params=cparams,
        )(x_pad, w3, bias2d)

    if L_out_pad != L_out:
        out = out[:, :, :L_out]
    return out


def init_conv_norm_params(key, in_ch, out_ch, kernel_size, bias=True, gain=1.0):
    """Mirror ConvNorm.__init__: xavier_uniform_ weight (gain('linear')=1.0),
    PyTorch-default uniform bias init."""
    wkey, bkey = jax.random.split(key)
    fan_in = in_ch * kernel_size
    fan_out = out_ch * kernel_size
    w_bound = gain * math.sqrt(6.0 / (fan_in + fan_out))
    weight = jax.random.uniform(
        wkey, (out_ch, in_ch, kernel_size), jnp.float32,
        minval=-w_bound, maxval=w_bound)
    b = None
    if bias:
        b_bound = 1.0 / math.sqrt(fan_in)
        b = jax.random.uniform(
            bkey, (out_ch,), jnp.float32, minval=-b_bound, maxval=b_bound)
    return weight, b


if __name__ == "__main__":
    # Small deterministic example: batch=2, in_ch=4, out_ch=8, L=16, kernel=3, pad=1
    B, C_in, C_out, L, K = 2, 4, 8, 16, 3
    stride, padding, dilation = 1, 1, 1

    key = jax.random.PRNGKey(0)
    xkey, pkey = jax.random.split(key)
    x = jax.random.normal(xkey, (B, C_in, L), jnp.float32)
    weight, bias = init_conv_norm_params(pkey, C_in, C_out, K, bias=True)

    # Fused (im2col) path — the one used for small channel counts.
    out = conv_norm_forward(x, weight, bias,
                            stride=stride, padding=padding, dilation=dilation)
    out = jax.block_until_ready(out)

    # Reference: XLA conv on the same bf16-cast operands, f32 accumulation.
    ref = lax.conv_general_dilated(
        x.astype(jnp.bfloat16), weight.astype(jnp.bfloat16),
        window_strides=(stride,), padding=[(padding, padding)],
        rhs_dilation=(dilation,),
        dimension_numbers=("NCH", "OIH", "NCH"),
        preferred_element_type=jnp.float32)
    ref = (ref + bias.reshape(1, C_out, 1)).astype(x.dtype)

    assert out.shape == ref.shape, (out.shape, ref.shape)
    err = float(jnp.max(jnp.abs(out - ref)))
    assert err < 1e-2, err

    # Also exercise the large-channel K-tap accumulation path on the same data.
    out2 = conv_norm_forward(x, weight, bias,
                             stride=stride, padding=padding, dilation=dilation,
                             fuse_taps=False)
    out2 = jax.block_until_ready(out2)
    err2 = float(jnp.max(jnp.abs(out2 - ref)))
    assert err2 < 1e-2, err2

    print("KERNEL_OK")
</pallas_src>

<mosaic_0001>
module attributes {stable_mosaic.version = 11 : i64} {
  func.func @kernel(%arg0: i32, %arg1: i32, %arg2: memref<1x12x128xbf16, #tpu.memory_space<vmem>>, %arg3: memref<8x12xbf16, #tpu.memory_space<vmem>>, %arg4: memref<8x1xf32, #tpu.memory_space<vmem>>, %arg5: memref<1x8x128xf32, #tpu.memory_space<vmem>>) attributes {dimension_semantics = [#tpu.dimension_semantics<parallel>, #tpu.dimension_semantics<parallel>], iteration_bounds = array<i64: 2, 1>, scalar_prefetch = 0 : i64, scratch_operands = 0 : i64, tpu.core_type = #tpu.core_type<tc>, window_params = [{transform_indices = @transform_0, window_bounds = array<i64: 1, 12, 128>}, {pipeline_mode = #tpu.pipeline_mode<synchronous>, transform_indices = @transform_1, window_bounds = array<i64: 8, 12>}, {pipeline_mode = #tpu.pipeline_mode<synchronous>, transform_indices = @transform_2, window_bounds = array<i64: 8, 1>}, {transform_indices = @transform_3, window_bounds = array<i64: 1, 8, 128>}]} {
    %c0 = arith.constant 0 : index
    %c0_0 = arith.constant 0 : index
    %0 = vector.load %arg3[%c0, %c0_0] : memref<8x12xbf16, #tpu.memory_space<vmem>>, vector<8x12xbf16>
    %c0_1 = arith.constant 0 : index
    %c0_2 = arith.constant 0 : index
    %c0_3 = arith.constant 0 : index
    %1 = vector.load %arg2[%c0_1, %c0_2, %c0_3] : memref<1x12x128xbf16, #tpu.memory_space<vmem>>, vector<1x12x128xbf16>
    %2 = vector.shape_cast %1 : vector<1x12x128xbf16> to vector<12x128xbf16>
    %cst = arith.constant dense<0.000000e+00> : vector<8x128xf32>
    %3 = tpu.matmul %0, %2, %cst {dimension_numbers = #tpu.dot_dimension_numbers<[1], [0], [0], [1], [0, 0, 1, 1], [], []>} : vector<8x12xbf16>, vector<12x128xbf16>, vector<8x128xf32> -> vector<8x128xf32>
    %c0_4 = arith.constant 0 : index
    %c0_5 = arith.constant 0 : index
    %4 = vector.load %arg4[%c0_4, %c0_5] : memref<8x1xf32, #tpu.memory_space<vmem>>, vector<8x1xf32>
    %5 = vector.broadcast %4 : vector<8x1xf32> to vector<8x128xf32>
    %6 = arith.addf %3, %5 : vector<8x128xf32>
    %c0_6 = arith.constant 0 : index
    %c0_7 = arith.constant 0 : index
    %c0_8 = arith.constant 0 : index
    %7 = vector.load %arg5[%c0_6, %c0_7, %c0_8] : memref<1x8x128xf32, #tpu.memory_space<vmem>>, vector<1x8x128xf32>
    %8 = vector.shape_cast %7 : vector<1x8x128xf32> to vector<8x128xf32>
    %9 = vector.shape_cast %6 : vector<8x128xf32> to vector<1x8x128xf32>
    tpu.vector_store %arg5[%c0_6, %c0_7, %c0_8], %9 {strides = array<i32>} : memref<1x8x128xf32, #tpu.memory_space<vmem>>, vector<1x8x128xf32>,
    return
  }
  func.func @transform_0(%arg0: i32, %arg1: i32) -> (i32, i32, i32) {
    %c0_i32 = arith.constant 0 : i32
    %c0_i32_0 = arith.constant 0 : i32
    return %arg0, %c0_i32, %arg1 : i32, i32, i32
  }
  func.func @transform_1(%arg0: i32, %arg1: i32) -> (i32, i32) {
    %c0_i32 = arith.constant 0 : i32
    %c0_i32_0 = arith.constant 0 : i32
    %c0_i32_1 = arith.constant 0 : i32
    return %c0_i32, %c0_i32_0 : i32, i32
  }
  func.func @transform_2(%arg0: i32, %arg1: i32) -> (i32, i32) {
    %c0_i32 = arith.constant 0 : i32
    %c0_i32_0 = arith.constant 0 : i32
    %c0_i32_1 = arith.constant 0 : i32
    return %c0_i32, %c0_i32_0 : i32, i32
  }
  func.func @transform_3(%arg0: i32, %arg1: i32) -> (i32, i32, i32) {
    %c0_i32 = arith.constant 0 : i32
    %c0_i32_0 = arith.constant 0 : i32
    return %arg0, %c0_i32, %arg1 : i32, i32, i32
  }
}

</mosaic_0001>

<llo_original>
// kernel: tpu_custom_call.1
$region0: #{tpu_custom_call.1}
  #allocation0 [shape = 'u32[]', space=smem, size = 0x4, offset = 0x4, fixed_abs, tag = 'smem constant byte address 0x4 - core index']
  #allocation1 [shape = 'u32[144,128]{1,0:T(1,128)}', space=vmem, size = 0x12000, scoped, tag = 'internal scratch']
  %s0 = inlined_call_operand.vmem [shape: bf16[2,12,128], index: 0, kind: input, shape index: {}]
  %s1 = inlined_call_operand.vmem [shape: bf16[8,12], index: 1, kind: input, shape index: {}]
  %s2 = inlined_call_operand.vmem [shape: f32[8,1], index: 2, kind: input, shape index: {}]
  %s3 = inlined_call_operand.hbm [shape: f32[2,8,128], index: 3, kind: output, shape index: {}]
  %s4 = sld [smem:[#allocation0]]
  $region45: #{tpu_custom_call.1} parent=0
    _
  %s6 = ssub.s32 1, %s4
  %s7 = scalar_select 0, %s6, %s4
  $region1: #{tpu_custom_call.1} parent=0
    #allocation2 [shape = 'u8[8192]{0}', space=vmem, size = 0x2000, scoped, tag = 'output window, operand 0']
    #allocation3 [shape = 's32[2]{0}', space=sflag, size = 0x8, scoped, tag = 'scoped memory for tpu_custom_call.1']
    %8 = vsyncpa [#allocation3], 0
    %s9 = scalar_lea.sflag [#allocation3], 1
    %10 = vsyncpa %s9, 0
    loop: start=0, step=1, limit=4
    $region2: #{tpu_custom_call.1} parent=1 // loop_pre_header
      _
    $region3: #{tpu_custom_call.1} parent=1 // loop_header
      %s12 = sphi 0, %s16
      %p13 = scmp.ge.s32.totalorder %s12, 4
      %s19 = sphi 0, %s31
      %s20 = sphi 0, %s27
      %s21 = sphi 0, %s19
      %s22 = sphi 0, %s20
      %s23 = sphi 0, %s21
      %s24 = sphi 0, %s22
      %s36 = sphi 0, %s38
      %s39 = sphi 0, %s36
      %s40 = sphi 0, %s39
      %s56 = sphi 0, %s40
      %s60 = sphi 0, %s60
      %s62 = sphi 0, %s60
      %s63 = sphi 0, %s62
      %s77 = sphi 0, %s63
      %s81 = sphi 0, %s81
      %s83 = sphi 0, %s81
      %s84 = sphi 0, %s83
      %s98 = sphi 0, %s84
      %s106 = sphi 0, %s108
      %s109 = sphi 0, %s106
      %s110 = sphi 0, %s109
      %s126 = sphi 0, %s110
    $region4: #{tpu_custom_call.1} parent=1 // loop_header_branch
      %15 = sbr.rel (%p13) target = $region8
    $region5: #{tpu_custom_call.1} parent=1 // loop_body
      %s17 = ssub.s32 %s12, 1
      %s18 = ssub.s32 %s12, 2
      %s25 = sadd.s32 1, %s20
      %p26 = scmp.ge.s32.totalorder %s25, 1
      %s27 = scalar_select %p26, 0, %s25
      %s28 = sadd.s32 1, %s19
      %s29 = scalar_select %p26, %s28, %s19
      %p30 = scmp.ge.s32.totalorder %s29, 2
      %s31 = scalar_select %p30, 0, %s29
      %s32 = ssub.s32 %s19, %s31
      %s33 = ssub.s32 %s20, %s27
      %s34 = sor.u32 %s32, %s33
      %p35 = scmp.eq.s32.totalorder %s34, 0
      %s37 = sadd.s32 %s36, 1
      %s38 = scalar_select %p35, %s36, %s37
      %p41 = pneg %p35
      %p42 = scmp.eq.s32.totalorder %s12, 1
      %p43 = por %p41, %p42
      %p44 = scmp.ne.s32.totalorder %s36, %s39
      %p45 = scmp.eq.s32.totalorder %s12, 0
      %p46 = por %p44, %p45
      %p47 = scmp.ne.s32.totalorder %s36, %s39
      %p48 = scmp.eq.s32.totalorder %s17, 1
      %p49 = por %p47, %p48
      %p50 = scmp.ne.s32.totalorder %s39, %s40
      %p51 = scmp.eq.s32.totalorder %s17, 0
      %p52 = por %p50, %p51
      %p53 = scmp.ne.s32.totalorder %s39, %s40
      %p54 = scmp.eq.s32.totalorder %s18, 1
      %p55 = por %p53, %p54
      %p57 = scmp.ne.s32.totalorder %s40, %s56
      %p58 = scmp.eq.s32.totalorder %s18, 0
      %p59 = por %p57, %p58
      %s61 = sadd.s32 %s60, 1
      %p64 = scmp.eq.s32.totalorder %s12, 1
      %p65 = scmp.ne.s32.totalorder %s60, %s62
      %p66 = scmp.eq.s32.totalorder %s12, 0
      %p67 = por %p65, %p66
      %p68 = scmp.ne.s32.totalorder %s60, %s62
      %p69 = scmp.eq.s32.totalorder %s17, 1
      %p70 = por %p68, %p69
      %p71 = scmp.ne.s32.totalorder %s62, %s63
      %p72 = scmp.eq.s32.totalorder %s17, 0
      %p73 = por %p71, %p72
      %p74 = scmp.ne.s32.totalorder %s62, %s63
      %p75 = scmp.eq.s32.totalorder %s18, 1
      %p76 = por %p74, %p75
      %p78 = scmp.ne.s32.totalorder %s63, %s77
      %p79 = scmp.eq.s32.totalorder %s18, 0
      %p80 = por %p78, %p79
      %s82 = sadd.s32 %s81, 1
      %p85 = scmp.eq.s32.totalorder %s12, 1
      %p86 = scmp.ne.s32.totalorder %s81, %s83
      %p87 = scmp.eq.s32.totalorder %s12, 0
      %p88 = por %p86, %p87
      %p89 = scmp.ne.s32.totalorder %s81, %s83
      %p90 = scmp.eq.s32.totalorder %s17, 1
      %p91 = por %p89, %p90
      %p92 = scmp.ne.s32.totalorder %s83, %s84
      %p93 = scmp.eq.s32.totalorder %s17, 0
      %p94 = por %p92, %p93
      %p95 = scmp.ne.s32.totalorder %s83, %s84
      %p96 = scmp.eq.s32.totalorder %s18, 1
      %p97 = por %p95, %p96
      %p99 = scmp.ne.s32.totalorder %s84, %s98
      %p100 = scmp.eq.s32.totalorder %s18, 0
      %p101 = por %p99, %p100
      %s102 = ssub.s32 %s19, %s31
      %s103 = ssub.s32 %s20, %s27
      %s104 = sor.u32 %s102, %s103
      %p105 = scmp.eq.s32.totalorder %s104, 0
      %s107 = sadd.s32 %s106, 1
      %s108 = scalar_select %p105, %s106, %s107
      %p111 = pneg %p105
      %p112 = scmp.eq.s32.totalorder %s12, 1
      %p113 = por %p111, %p112
      %p114 = scmp.ne.s32.totalorder %s106, %s109
      %p115 = scmp.eq.s32.totalorder %s12, 0
      %p116 = por %p114, %p115
      %p117 = scmp.ne.s32.totalorder %s106, %s109
      %p118 = scmp.eq.s32.totalorder %s17, 1
      %p119 = por %p117, %p118
      %p120 = scmp.ne.s32.totalorder %s109, %s110
      %p121 = scmp.eq.s32.totalorder %s17, 0
      %p122 = por %p120, %p121
      %p123 = scmp.ne.s32.totalorder %s109, %s110
      %p124 = scmp.eq.s32.totalorder %s18, 1
      %p125 = por %p123, %p124
      %p127 = scmp.ne.s32.totalorder %s110, %s126
      %p128 = scmp.eq.s32.totalorder %s18, 0
      %p129 = por %p127, %p128
      %p130 = scmp.le.s32.totalorder 1, %s12
      %p131 = scmp.lt.s32.totalorder %s12, 3
      %p132 = pnand %p130, %p131
      %p133 = pneg %p132
      // Predicated region
      $region9: #{tpu_custom_call.1} parent=5 // pred_check
        _
      $region10: #{tpu_custom_call.1} parent=5 // pred_check_branch
        %135 = sbr.rel (%p132) target = $region12
      $region11: #{tpu_custom_call.1} parent=5 // pred_region
        %s136 = ssub.s32 %s12, 1
        // Predicated region
        $region13: #{tpu_custom_call.1} parent=11 // pred_check
          %p137 = pneg %p73
        $region14: #{tpu_custom_call.1} parent=11 // pred_check_branch
          %139 = sbr.rel (%p137) target = $region16
        $region15: #{tpu_custom_call.1} parent=11 // pred_region
          _
        $region16: #{tpu_custom_call.1} parent=11 // pred_fallthru
          _
        // Predicated region
        $region17: #{tpu_custom_call.1} parent=11 // pred_check
          %p140 = pneg %p94
        $region18: #{tpu_custom_call.1} parent=11 // pred_check_branch
          %142 = sbr.rel (%p140) target = $region20
        $region19: #{tpu_custom_call.1} parent=11 // pred_region
          _
        $region20: #{tpu_custom_call.1} parent=11 // pred_fallthru
          _
      $region12: #{tpu_custom_call.1} parent=5 // pred_fallthru
        _
      %p143 = scmp.lt.s32.totalorder %s12, 2
      // Predicated region
      $region21: #{tpu_custom_call.1} parent=5 // pred_check
        %p144 = pneg %p143
      $region22: #{tpu_custom_call.1} parent=5 // pred_check_branch
        %146 = sbr.rel (%p144) target = $region24
      $region23: #{tpu_custom_call.1} parent=5 // pred_region
        // Predicated region
        $region25: #{tpu_custom_call.1} parent=23 // pred_check
          %p147 = pneg %p46
        $region26: #{tpu_custom_call.1} parent=23 // pred_check_branch
          %149 = sbr.rel (%p147) target = $region28
        $region27: #{tpu_custom_call.1} parent=23 // pred_region
          %p150 = scmp.lt.s32.totalorder %s19, 1
          %s151 = scalar_select %p150, %s19, 1
          %p152 = scmp.lt.s32.totalorder %s20, 0
          %s153 = scalar_select %p152, %s20, 0
          %s154 = smul.addr %s151, 2
          %s155 = sadd.s32 %s153, %s154
          %s156 = smul.addr %s155, 4
          %s157 = scalar_lea.vmem %s0, %s156
        $region28: #{tpu_custom_call.1} parent=23 // pred_fallthru
          _
      $region24: #{tpu_custom_call.1} parent=5 // pred_fallthru
        _
      %p158 = scmp.le.s32.totalorder 1, %s12
      %p159 = scmp.lt.s32.totalorder %s12, 3
      %p160 = pnand %p158, %p159
      %p161 = pneg %p160
      // Predicated region
      $region29: #{tpu_custom_call.1} parent=5 // pred_check
        _
      $region30: #{tpu_custom_call.1} parent=5 // pred_check_branch
        %163 = sbr.rel (%p160) target = $region32
      $region31: #{tpu_custom_call.1} parent=5 // pred_region
        %s164 = ssub.s32 %s12, 1
        %p165 = scmp.lt.s32.totalorder %s21, 1
        %s166 = scalar_select %p165, %s21, 1
        %p167 = scmp.lt.s32.totalorder %s22, 0
        %s168 = scalar_select %p167, %s22, 0
        %s169 = smul.addr %s166, 2
        %s170 = sadd.s32 %s168, %s169
        %s171 = smul.addr %s170, 4
        %s172 = scalar_lea.vmem %s0, %s171
        %p173 = pneg %p52
        %p174 = pneg %p49
        %p175 = pneg %p73
        %p176 = pneg %p70
        %p177 = pneg %p94
        %p178 = pneg %p91
        %p179 = pneg %p122
        %p180 = pneg %p119
        %s181 = sand.u32 %s109, 1
        %s182 = scalar_lea.sflag [#allocation3], %s181
        %s183 = sand.u32 %s109, 1
        %s184 = smul.addr %s183, 8
        %s185 = scalar_lea.vmem [#allocation2], %s184
        %p186 = scmp.lt.s32.totalorder %s21, 1
        %s187 = scalar_select %p186, %s21, 1
        %p188 = scmp.lt.s32.totalorder %s22, 0
        %s189 = scalar_select %p188, %s22, 0
        %s190 = smul.addr %s187, 2
        %s191 = sadd.s32 %s189, %s190
        %s192 = smul.addr %s191, 4
        %s193 = scalar_lea.vmem %s0, %s192
        %v195 = vld [vmem:[%s1] sm:$0xf]
        %v196 = vld [vmem:[%s193] sm:$0xf]
        %v197 = vld [vmem:[%s193 + $0x4] sm:$0x3]
        %v198 = vld [vmem:[%s2] sm:$0xff]
        %200 = vset.pattern.permute.xlu0 0
        %201 = vperm.xlu0 %200, %v198
        %v202 = vpop.permute.xlu0 %201
        %v206 = vunpack.c.l.b16 %v196
        %v207 = vunpack.c.l.b16 %v197
        %v208 = vpack.c.b16 %v207, %v206
        %vm209 = vcmask 97280
        %v211 = vsel %vm209, %v195, 0
        %vm213 = vcmask 1045504
        %v215 = vsel %vm213, %v208, 0
        %217 = vmatprep.subr.bf16.mxu0 0
        %218 = vmatpush1.bf16.msra.mxu0 0
        %219 = vmatprep.subr.bf16.mxu0 0
        %220 = vmatpush1.bf16.msra.mxu0 0
        %221 = vmatprep.subr.bf16.mxu0 0
        %222 = vmatpush1.bf16.msra.mxu0 0
        %223 = vmatprep.subr.bf16.mxu0 0
        %224 = vmatpush1.bf16.msra.mxu0 0
        %225 = vmatprep.subr.bf16.mxu0 0
        %226 = vmatpush1.bf16.msra.mxu0 0
        %227 = vmatprep.subr.bf16.mxu0 0
        %228 = vmatpush1.bf16.msra.mxu0 0
        %229 = vmatprep.subr.bf16.mxu0 0
        %230 = vmatpush1.bf16.msra.mxu0 0
        %231 = vmatprep.subr.bf16.mxu0 0
        %232 = vmatpush1.bf16.msra.mxu0 %v215
        %233 = vmatprep.subr.bf16.mxu0 0
        %234 = vmatpush2.bf16.msra.mxu0 0
        %235 = vmatprep.subr.bf16.mxu0 0
        %236 = vmatpush2.bf16.msra.mxu0 0
        %237 = vmatprep.subr.bf16.mxu0 0
        %238 = vmatpush2.bf16.msra.mxu0 0
        %239 = vmatprep.subr.bf16.mxu0 0
        %240 = vmatpush2.bf16.msra.mxu0 0
        %241 = vmatprep.subr.bf16.mxu0 0
        %242 = vmatpush2.bf16.msra.mxu0 0
        %243 = vmatprep.subr.bf16.mxu0 0
        %244 = vmatpush2.bf16.msra.mxu0 0
        %245 = vmatprep.subr.bf16.mxu0 0
        %246 = vmatpush2.bf16.msra.mxu0 0
        %247 = vmatprep.subr.bf16.mxu0 0
        %248 = vmatpush2.bf16.msra.mxu0 0
        %249 = vmatprep.mubr.bf16.mxu0 0
        %250 = vmatmul.mubr.bf16.gmra.mxu0 %v211
        %v251 = vpop.f32.mrf.mxu0
        %v252 = vadd.f32 %v202, %v251
        %v253 = vpop.f32.mrf.mxu0
        %v254 = vpop.f32.mrf.mxu0
        %v255 = vpop.f32.mrf.mxu0
        %256 = vdwg.mxu0
        %257 = vst [vmem:[%s185] sm:$0xff] %v252
        %s258 = sand.u32 %s109, 1
        %s259 = scalar_lea.sflag [#allocation3], %s258
        %s260 = sand.u32 %s109, 1
        %s261 = smul.addr %s260, 8
        %s262 = scalar_lea.vmem [#allocation2], %s261
        // Predicated region
        $region33: #{tpu_custom_call.1} parent=31 // pred_check
          %p263 = pneg %p119
        $region34: #{tpu_custom_call.1} parent=31 // pred_check_branch
          %265 = sbr.rel (%p263) target = $region36
        $region35: #{tpu_custom_call.1} parent=31 // pred_region
          %s267 = ssub.s32 128, 128
          %268 = vsyncadd %s259, %s267
          %s269 = sadd.s32 %s22, %s21
          %s270 = smul.addr %s269, 128
          %s271 = scalar_lea.hbm %s3, %s270
          %s273 = sshll.u32 %s262, 4
          %s274 = int_to_ptr.vmem [resolvable:$true] %s273
          %276 = dma.vmem_to_hbm [thread:$0]  %s274, 128, %s271, %s259
        $region36: #{tpu_custom_call.1} parent=31 // pred_fallthru
          _
      $region32: #{tpu_custom_call.1} parent=5 // pred_fallthru
        _
      %p277 = scmp.le.s32.totalorder 2, %s12
      // Predicated region
      $region37: #{tpu_custom_call.1} parent=5 // pred_check
        %p278 = pneg %p277
      $region38: #{tpu_custom_call.1} parent=5 // pred_check_branch
        %280 = sbr.rel (%p278) target = $region40
      $region39: #{tpu_custom_call.1} parent=5 // pred_region
        %s281 = ssub.s32 %s12, 2
        // Predicated region
        $region41: #{tpu_custom_call.1} parent=39 // pred_check
          %p282 = pneg %p125
        $region42: #{tpu_custom_call.1} parent=39 // pred_check_branch
          %284 = sbr.rel (%p282) target = $region44
        $region43: #{tpu_custom_call.1} parent=39 // pred_region
          %s285 = sand.u32 %s110, 1
          %s286 = scalar_lea.sflag [#allocation3], %s285
          %s287 = sand.u32 %s110, 1
          %s288 = smul.addr %s287, 8
          %s289 = scalar_lea.vmem [#allocation2], %s288
          %290 = dma.done %s286, 128
        $region44: #{tpu_custom_call.1} parent=39 // pred_fallthru
          _
      $region40: #{tpu_custom_call.1} parent=5 // pred_fallthru
        _
    $region6: #{tpu_custom_call.1} parent=1 // loop_footer
      %s16 = sadd.s32 1, %s12
    $region7: #{tpu_custom_call.1} parent=1 // loop_footer_branch
      %11 = sbr.rel target = $region3
    $region8: #{tpu_custom_call.1} parent=1 // loop_exit
      _
    %291 = vsyncpa [#allocation3], 1
    %s292 = scalar_lea.sflag [#allocation3], 1
    %293 = vsyncpa %s292, 1

</llo_original>
